<compile_context>
chip_gen: v6e
topology: v6e:2x2x1
jax: 0.10.0
libtpu: 0.0.40
codegen_flags: <defaults>
</compile_context>

<pallas_src>
import math

import jax
import jax.numpy as jnp
from jax.experimental import pallas as pl
from jax.experimental.pallas import tpu as pltpu

K_SCALE = 2.0
LBD_SCALE = 2.0
_LOG_K_SCALE = math.log(K_SCALE)
_LOG_LBD_SCALE = math.log(LBD_SCALE)
_HALF_LOG_2PI = 0.5 * math.log(2.0 * math.pi)


def _round_up(x, m):
    return ((x + m - 1) // m) * m


def _weibull_vi_kernel(musd_ref, eps_ref, data_ref, out_ref):
    """One (N-tile, D-tile) grid step.

    musd_ref : (4, 4) VMEM   rows = [mu, sd, -1/(2 sd^2), -log(sd)-0.5 log(2pi)]
                             cols = [alpha, beta_0, beta_xloc, beta_yloc]
    eps_ref  : (TN, 4) VMEM  standard-normal draws for this N tile
    data_ref : (4, TD) VMEM  rows = [x_loc, y_loc, log(y), lane_mask]
    out_ref  : (TN, 128) VMEM  per-sample (penalty - sum_d log_prob), broadcast
                               over lanes; accumulated across the D grid axis.
    """
    j = pl.program_id(1)                                # D-tile index (reduction)

    eps = eps_ref[...]                                  # (TN, 4)
    mu_row = musd_ref[0:1, :]                           # (1, 4)
    sd_row = musd_ref[1:2, :]                           # (1, 4)
    lat = eps * sd_row + mu_row                         # (TN, 4) reparameterized latents

    alpha = lat[:, 0:1]                                 # (TN, 1)
    beta_0 = lat[:, 1:2]
    beta_x = lat[:, 2:3]
    beta_y = lat[:, 3:4]

    # log k = log(K_SCALE * sigmoid(alpha)) = log(K_SCALE) - log(1 + exp(-alpha))
    log_k = _LOG_K_SCALE - jnp.log1p(jnp.exp(-alpha))   # (TN, 1)

    x_row = data_ref[0:1, :]                            # (1, TD)
    yl_row = data_ref[1:2, :]
    log_y = data_ref[2:3, :]
    mask = data_ref[3:4, :]

    # -unc_lbd ; a single exp is shared between lbd and log(lbd).
    neg_unc = beta_0 + beta_x * x_row + beta_y * yl_row        # (TN, TD)
    e = jnp.exp(neg_unc)                                        # exp(-unc_lbd)
    lbd = LBD_SCALE / (1.0 + e)                                 # sigmoid(unc_lbd)*LBD_SCALE
    log_lbd = _LOG_LBD_SCALE - jnp.log1p(e)                     # log(lbd)

    # Weibull(scale=k, concentration=lbd).log_prob(y)
    #   = log(lbd) - log(k) + (lbd-1)*(log y - log k) - exp(lbd*(log y - log k))
    lys = log_y - log_k                                         # (TN, TD)
    t = lbd * lys
    log_prob = log_lbd - log_k + t - lys - jnp.exp(t)           # (TN, TD)
    log_prob = jnp.where(mask > 0.0, log_prob, 0.0)             # zero padded D lanes
    neg_lls = -jnp.sum(log_prob, axis=1, keepdims=True)         # (TN, 1)

    @pl.when(j == 0)
    def _init():
        # Gaussian VI penalty (only once per N tile): sum_p Normal(mu, sd).log_prob(lat)
        diff = lat - mu_row                                      # = eps * sd
        pen = diff * diff * musd_ref[2:3, :] + musd_ref[3:4, :]  # (TN, 4)
        penalty = jnp.sum(pen, axis=1, keepdims=True)            # (TN, 1)
        out_ref[...] = jnp.broadcast_to(penalty, out_ref.shape)

    out_ref[...] += jnp.broadcast_to(neg_lls, out_ref.shape)


def weibull_vi_loss(param, eps, x_loc, y_loc, y, *, tn=None, td=None):
    """Pallas forward of Model.forward: -mean_n(sum_d log_prob) + mean_n(penalty)."""
    eps = eps.astype(jnp.float32)
    n = eps.shape[0]
    d = x_loc.shape[0]

    # ---- tile sizes (sublane/lane aligned; keep per-step temporaries small) --
    if tn is None:
        tn = min(128, _round_up(n, 8))
    if td is None:
        td = min(1024, _round_up(d, 128))
    assert tn % 8 == 0 and td % 128 == 0
    n_pad = _round_up(n, tn)
    d_pad = _round_up(d, td)

    # ---- tiny VI-parameter table (4, 4) --------------------------------------
    p = param.astype(jnp.float32)
    mu = p[0::2]                                   # means: [alpha, beta0, beta_x, beta_y]
    sd = jnp.exp(0.5 * p[1::2])                    # exp(0.5 * logvar)
    musd = jnp.stack(
        [mu, sd, -0.5 / (sd * sd), -jnp.log(sd) - _HALF_LOG_2PI], axis=0)   # (4, 4)

    # ---- stacked, lane-padded data (4, d_pad): x_loc, y_loc, log(y), mask ----
    pad = d_pad - d
    x_p = jnp.pad(x_loc.astype(jnp.float32), (0, pad))
    yl_p = jnp.pad(y_loc.astype(jnp.float32), (0, pad))
    logy_p = jnp.pad(jnp.log(y.astype(jnp.float32)), (0, pad))   # pad AFTER log -> finite
    mask_p = jnp.pad(jnp.ones((d,), jnp.float32), (0, pad))
    data = jnp.stack([x_p, yl_p, logy_p, mask_p], axis=0)        # (4, d_pad)

    eps_p = jnp.pad(eps, ((0, n_pad - n), (0, 0)))               # padded rows finite, sliced off

    grid = (n_pad // tn, d_pad // td)
    out = pl.pallas_call(
        _weibull_vi_kernel,
        out_shape=jax.ShapeDtypeStruct((n_pad, 128), jnp.float32),
        grid=grid,
        in_specs=[
            pl.BlockSpec((4, 4), lambda i, j: (0, 0)),      # musd (whole, resident)
            pl.BlockSpec((tn, 4), lambda i, j: (i, 0)),     # eps: N tile
            pl.BlockSpec((4, td), lambda i, j: (0, j)),     # data: D tile
        ],
        out_specs=pl.BlockSpec((tn, 128), lambda i, j: (i, 0)),  # accumulator over j
        compiler_params=pltpu.CompilerParams(
            dimension_semantics=("parallel", "arbitrary")),
    )(musd, eps_p, data)

    # per-sample c_n = penalty_n - sum_d log_prob_{n,d} ; loss = mean_n c_n
    return jnp.sum(out[:n, 0]) / n


def weibull_vi_loss_ref(param, eps, x_loc, y_loc, y):
    """Pure-JAX reference matching the PyTorch forward (same eps draws)."""
    p = param.astype(jnp.float32)
    a_mu, a_lv, b0_mu, b0_lv, bx_mu, bx_lv, by_mu, by_lv = [p[i] for i in range(8)]
    a_sd, b0_sd, bx_sd, by_sd = (jnp.exp(0.5 * a_lv), jnp.exp(0.5 * b0_lv),
                                 jnp.exp(0.5 * bx_lv), jnp.exp(0.5 * by_lv))
    alpha = eps[:, 0:1] * a_sd + a_mu
    beta_0 = eps[:, 1:2] * b0_sd + b0_mu
    beta_x = eps[:, 2:3] * bx_sd + bx_mu
    beta_y = eps[:, 3:4] * by_sd + by_mu
    unc_lbd = -(beta_0 + beta_x * x_loc[None, :] + beta_y * y_loc[None, :])
    k = jax.nn.sigmoid(alpha) * K_SCALE
    lbd = jax.nn.sigmoid(unc_lbd) * LBD_SCALE
    log_s = jnp.log(k)
    lys = jnp.log(y[None, :]) - log_s
    lp = jnp.log(lbd) - log_s + (lbd - 1.0) * lys - jnp.exp(lbd * lys)
    lls_mean = jnp.mean(jnp.sum(lp, axis=-1))

    def nlp(mu, sd, s):
        return -((s - mu) ** 2) / (2.0 * sd * sd) - jnp.log(sd) - _HALF_LOG_2PI

    penalty = nlp(a_mu, a_sd, alpha) + nlp(b0_mu, b0_sd, beta_0) + \
        nlp(bx_mu, bx_sd, beta_x) + nlp(by_mu, by_sd, beta_y)
    return -lls_mean + jnp.mean(penalty)


if __name__ == "__main__":
    key = jax.random.PRNGKey(0)
    k_eps, k_x, k_yl, k_y, k_eps2, k_x2, k_yl2, k_y2 = jax.random.split(key, 8)

    # --- case 1: small shapes, single (1,1) grid ----------------------------
    n_sample, D = 8, 16
    param = jnp.zeros((8,), dtype=jnp.float32)                    # nn.Parameter(torch.zeros(8))
    eps = jax.random.normal(k_eps, (n_sample, 4), dtype=jnp.float32)
    x_loc = jax.random.normal(k_x, (D,), dtype=jnp.float32)
    y_loc = jax.random.normal(k_yl, (D,), dtype=jnp.float32)
    y = jax.random.uniform(k_y, (D,), dtype=jnp.float32, minval=0.5, maxval=2.0)

    out = jax.block_until_ready(weibull_vi_loss(param, eps, x_loc, y_loc, y))
    ref = weibull_vi_loss_ref(param, eps, x_loc, y_loc, y)
    assert jnp.allclose(out, ref, rtol=1e-4, atol=1e-4), (out, ref)

    # --- case 2: n_sample=100, exercises N/D padding + multi-tile grid ------
    n2, D2 = 100, 200
    param2 = jnp.array([0.3, -0.2, 0.1, 0.4, -0.3, 0.2, 0.05, -0.1], jnp.float32)
    eps2 = jax.random.normal(k_eps2, (n2, 4), dtype=jnp.float32)
    x2 = jax.random.normal(k_x2, (D2,), dtype=jnp.float32)
    yl2 = jax.random.normal(k_yl2, (D2,), dtype=jnp.float32)
    y2 = jax.random.uniform(k_y2, (D2,), dtype=jnp.float32, minval=0.5, maxval=2.0)

    out2 = jax.block_until_ready(
        weibull_vi_loss(param2, eps2, x2, yl2, y2, tn=8, td=128))
    ref2 = weibull_vi_loss_ref(param2, eps2, x2, yl2, y2)
    assert jnp.allclose(out2, ref2, rtol=1e-4, atol=1e-4), (out2, ref2)

    print("KERNEL_OK")
</pallas_src>

<mosaic_0001>
module attributes {stable_mosaic.version = 11 : i64} {
  func.func @_weibull_vi_kernel(%arg0: i32, %arg1: i32, %arg2: memref<4x4xf32, #tpu.memory_space<vmem>>, %arg3: memref<8x4xf32, #tpu.memory_space<vmem>>, %arg4: memref<4x128xf32, #tpu.memory_space<vmem>>, %arg5: memref<8x128xf32, #tpu.memory_space<vmem>>) attributes {dimension_semantics = [#tpu.dimension_semantics<parallel>, #tpu.dimension_semantics<arbitrary>], iteration_bounds = array<i64: 1, 1>, scalar_prefetch = 0 : i64, scratch_operands = 0 : i64, tpu.core_type = #tpu.core_type<tc>, window_params = [{pipeline_mode = #tpu.pipeline_mode<synchronous>, transform_indices = @transform_0, window_bounds = array<i64: 4, 4>}, {transform_indices = @transform_1, window_bounds = array<i64: 8, 4>}, {transform_indices = @transform_2, window_bounds = array<i64: 4, 128>}, {transform_indices = @transform_3, window_bounds = array<i64: 8, 128>}]} {
    %c0 = arith.constant 0 : index
    %c0_0 = arith.constant 0 : index
    %0 = vector.load %arg3[%c0, %c0_0] : memref<8x4xf32, #tpu.memory_space<vmem>>, vector<8x4xf32>
    %c0_1 = arith.constant 0 : index
    %c0_2 = arith.constant 0 : index
    %1 = vector.load %arg2[%c0_1, %c0_2] : memref<4x4xf32, #tpu.memory_space<vmem>>, vector<1x4xf32>
    %c1 = arith.constant 1 : index
    %c0_3 = arith.constant 0 : index
    %2 = vector.load %arg2[%c1, %c0_3] : memref<4x4xf32, #tpu.memory_space<vmem>>, vector<1x4xf32>
    %3 = vector.broadcast %2 : vector<1x4xf32> to vector<8x4xf32>
    %4 = arith.mulf %0, %3 : vector<8x4xf32>
    %5 = vector.broadcast %1 : vector<1x4xf32> to vector<8x4xf32>
    %6 = arith.addf %4, %5 : vector<8x4xf32>
    %7 = vector.extract_strided_slice %6 {offsets = [0, 0], sizes = [8, 1], strides = [1, 1]} : vector<8x4xf32> to vector<8x1xf32>
    %8 = vector.extract_strided_slice %6 {offsets = [0, 1], sizes = [8, 1], strides = [1, 1]} : vector<8x4xf32> to vector<8x1xf32>
    %9 = vector.extract_strided_slice %6 {offsets = [0, 2], sizes = [8, 1], strides = [1, 1]} : vector<8x4xf32> to vector<8x1xf32>
    %10 = vector.extract_strided_slice %6 {offsets = [0, 3], sizes = [8, 1], strides = [1, 1]} : vector<8x4xf32> to vector<8x1xf32>
    %cst = arith.constant 0.000000e+00 : f32
    %11 = vector.broadcast %cst : f32 to vector<8x1xf32>
    %12 = arith.subf %11, %7 : vector<8x1xf32>
    %13 = math.exp %12 : vector<8x1xf32>
    %14 = math.log1p %13 : vector<8x1xf32>
    %cst_4 = arith.constant 0.693147182 : f32
    %15 = vector.broadcast %cst_4 : f32 to vector<8x1xf32>
    %16 = arith.subf %15, %14 : vector<8x1xf32>
    %c0_5 = arith.constant 0 : index
    %c0_6 = arith.constant 0 : index
    %17 = vector.load %arg4[%c0_5, %c0_6] : memref<4x128xf32, #tpu.memory_space<vmem>>, vector<1x128xf32>
    %c1_7 = arith.constant 1 : index
    %c0_8 = arith.constant 0 : index
    %18 = vector.load %arg4[%c1_7, %c0_8] : memref<4x128xf32, #tpu.memory_space<vmem>>, vector<1x128xf32>
    %c2 = arith.constant 2 : index
    %c0_9 = arith.constant 0 : index
    %19 = vector.load %arg4[%c2, %c0_9] : memref<4x128xf32, #tpu.memory_space<vmem>>, vector<1x128xf32>
    %c3 = arith.constant 3 : index
    %c0_10 = arith.constant 0 : index
    %20 = vector.load %arg4[%c3, %c0_10] : memref<4x128xf32, #tpu.memory_space<vmem>>, vector<1x128xf32>
    %21 = vector.broadcast %9 : vector<8x1xf32> to vector<8x128xf32>
    %22 = vector.broadcast %17 : vector<1x128xf32> to vector<8x128xf32>
    %23 = arith.mulf %21, %22 : vector<8x128xf32>
    %24 = vector.broadcast %8 : vector<8x1xf32> to vector<8x128xf32>
    %25 = arith.addf %24, %23 : vector<8x128xf32>
    %26 = vector.broadcast %10 : vector<8x1xf32> to vector<8x128xf32>
    %27 = vector.broadcast %18 : vector<1x128xf32> to vector<8x128xf32>
    %28 = arith.mulf %26, %27 : vector<8x128xf32>
    %29 = arith.addf %25, %28 : vector<8x128xf32>
    %30 = math.exp %29 : vector<8x128xf32>
    %cst_11 = arith.constant 1.000000e+00 : f32
    %31 = vector.broadcast %cst_11 : f32 to vector<8x128xf32>
    %32 = arith.addf %31, %30 : vector<8x128xf32>
    %cst_12 = arith.constant 2.000000e+00 : f32
    %33 = vector.broadcast %cst_12 : f32 to vector<8x128xf32>
    %34 = arith.divf %33, %32 : vector<8x128xf32>
    %35 = math.log1p %30 : vector<8x128xf32>
    %cst_13 = arith.constant 0.693147182 : f32
    %36 = vector.broadcast %cst_13 : f32 to vector<8x128xf32>
    %37 = arith.subf %36, %35 : vector<8x128xf32>
    %38 = vector.broadcast %19 : vector<1x128xf32> to vector<8x128xf32>
    %39 = vector.broadcast %16 : vector<8x1xf32> to vector<8x128xf32>
    %40 = arith.subf %38, %39 : vector<8x128xf32>
    %41 = arith.mulf %34, %40 : vector<8x128xf32>
    %42 = vector.broadcast %16 : vector<8x1xf32> to vector<8x128xf32>
    %43 = arith.subf %37, %42 : vector<8x128xf32>
    %44 = arith.addf %43, %41 : vector<8x128xf32>
    %45 = arith.subf %44, %40 : vector<8x128xf32>
    %46 = math.exp %41 : vector<8x128xf32>
    %47 = arith.subf %45, %46 : vector<8x128xf32>
    %cst_14 = arith.constant 0.000000e+00 : f32
    %48 = vector.broadcast %cst_14 : f32 to vector<1x128xf32>
    %49 = arith.cmpf ogt, %20, %48 : vector<1x128xf32>
    %cst_15 = arith.constant 0.000000e+00 : f32
    %50 = vector.shape_cast %49 : vector<1x128xi1> to vector<1x128xi1>
    %51 = vector.broadcast %50 : vector<1x128xi1> to vector<8x128xi1>
    %52 = vector.broadcast %cst_15 : f32 to vector<8x128xf32>
    %53 = arith.select %51, %47, %52 : vector<8x128xi1>, vector<8x128xf32>
    %cst_16 = arith.constant dense<0.000000e+00> : vector<8xf32>
    %54 = vector.multi_reduction <add>, %53, %cst_16 [1] : vector<8x128xf32> to vector<8xf32>
    %55 = vector.shape_cast %54 : vector<8xf32> to vector<8x1xf32>
    %cst_17 = arith.constant 0.000000e+00 : f32
    %56 = vector.broadcast %cst_17 : f32 to vector<8x1xf32>
    %57 = arith.subf %56, %55 : vector<8x1xf32>
    %c0_i32 = arith.constant 0 : i32
    %58 = arith.cmpi eq, %arg1, %c0_i32 : i32
    %59 = arith.extui %58 : i1 to i32
    %c0_i32_18 = arith.constant 0 : i32
    %60 = arith.cmpi ne, %59, %c0_i32_18 : i32
    scf.if %60 {
      %66 = vector.broadcast %1 : vector<1x4xf32> to vector<8x4xf32>
      %67 = arith.subf %6, %66 : vector<8x4xf32>
      %68 = arith.mulf %67, %67 : vector<8x4xf32>
      %c2_23 = arith.constant 2 : index
      %c0_24 = arith.constant 0 : index
      %69 = vector.load %arg2[%c2_23, %c0_24] : memref<4x4xf32, #tpu.memory_space<vmem>>, vector<1x4xf32>
      %70 = vector.broadcast %69 : vector<1x4xf32> to vector<8x4xf32>
      %71 = arith.mulf %68, %70 : vector<8x4xf32>
      %c3_25 = arith.constant 3 : index
      %c0_26 = arith.constant 0 : index
      %72 = vector.load %arg2[%c3_25, %c0_26] : memref<4x4xf32, #tpu.memory_space<vmem>>, vector<1x4xf32>
      %73 = vector.broadcast %72 : vector<1x4xf32> to vector<8x4xf32>
      %74 = arith.addf %71, %73 : vector<8x4xf32>
      %cst_27 = arith.constant dense<0.000000e+00> : vector<8xf32>
      %75 = vector.multi_reduction <add>, %74, %cst_27 [1] : vector<8x4xf32> to vector<8xf32>
      %76 = vector.shape_cast %75 : vector<8xf32> to vector<8x1xf32>
      %77 = vector.shape_cast %76 : vector<8x1xf32> to vector<8x1xf32>
      %78 = vector.broadcast %77 : vector<8x1xf32> to vector<8x128xf32>
      %c0_28 = arith.constant 0 : index
      %c0_29 = arith.constant 0 : index
      %79 = vector.load %arg5[%c0_28, %c0_29] : memref<8x128xf32, #tpu.memory_space<vmem>>, vector<8x128xf32>
      tpu.vector_store %arg5[%c0_28, %c0_29], %78 {strides = array<i32>} : memref<8x128xf32, #tpu.memory_space<vmem>>, vector<8x128xf32>,
    } else {
    }
    %c0_19 = arith.constant 0 : index
    %c0_20 = arith.constant 0 : index
    %61 = vector.load %arg5[%c0_19, %c0_20] : memref<8x128xf32, #tpu.memory_space<vmem>>, vector<8x128xf32>
    %62 = vector.shape_cast %57 : vector<8x1xf32> to vector<8x1xf32>
    %63 = vector.broadcast %62 : vector<8x1xf32> to vector<8x128xf32>
    %64 = arith.addf %61, %63 : vector<8x128xf32>
    %c0_21 = arith.constant 0 : index
    %c0_22 = arith.constant 0 : index
    %65 = vector.load %arg5[%c0_21, %c0_22] : memref<8x128xf32, #tpu.memory_space<vmem>>, vector<8x128xf32>
    tpu.vector_store %arg5[%c0_21, %c0_22], %64 {strides = array<i32>} : memref<8x128xf32, #tpu.memory_space<vmem>>, vector<8x128xf32>,
    return
  }
  func.func @transform_0(%arg0: i32, %arg1: i32) -> (i32, i32) {
    %c0_i32 = arith.constant 0 : i32
    %c0_i32_0 = arith.constant 0 : i32
    %c0_i32_1 = arith.constant 0 : i32
    return %c0_i32, %c0_i32_0 : i32, i32
  }
  func.func @transform_1(%arg0: i32, %arg1: i32) -> (i32, i32) {
    %c0_i32 = arith.constant 0 : i32
    %c0_i32_0 = arith.constant 0 : i32
    return %arg0, %c0_i32 : i32, i32
  }
  func.func @transform_2(%arg0: i32, %arg1: i32) -> (i32, i32) {
    %c0_i32 = arith.constant 0 : i32
    %c0_i32_0 = arith.constant 0 : i32
    return %c0_i32, %arg1 : i32, i32
  }
  func.func @transform_3(%arg0: i32, %arg1: i32) -> (i32, i32) {
    %c0_i32 = arith.constant 0 : i32
    %c0_i32_0 = arith.constant 0 : i32
    return %arg0, %c0_i32 : i32, i32
  }
}

</mosaic_0001>

<llo_original>
// kernel: tpu_custom_call.1
$region0: #{tpu_custom_call.1}
  #allocation0 [shape = 'u32[]', space=smem, size = 0x4, offset = 0x4, fixed_abs, tag = 'smem constant byte address 0x4 - core index']
  #allocation1 [shape = 'u32[144,128]{1,0:T(1,128)}', space=vmem, size = 0x12000, scoped, tag = 'internal scratch']
  %s0 = inlined_call_operand.vmem [shape: f32[4,4], index: 0, kind: input, shape index: {}]
  %s1 = inlined_call_operand.vmem [shape: f32[8,4], index: 1, kind: input, shape index: {}]
  %s2 = inlined_call_operand.vmem [shape: f32[4,128], index: 2, kind: input, shape index: {}]
  %s3 = inlined_call_operand.hbm [shape: f32[8,128], index: 3, kind: output, shape index: {}]
  %s4 = sld [smem:[#allocation0]]
  $region26: #{tpu_custom_call.1} parent=0
    _
  %s6 = ssub.s32 1, %s4
  %s7 = scalar_select 0, %s6, %s4
  $region1: #{tpu_custom_call.1} parent=0
    #allocation2 [shape = 'u8[4096]{0}', space=vmem, size = 0x1000, scoped, tag = 'output window, operand 0, single buffered']
    #allocation3 [shape = 's32[1]{0}', space=sflag, size = 0x4, scoped, tag = 'scoped memory for tpu_custom_call.1']
    %8 = vsyncpa [#allocation3], 0
    // Predicated region
    $region2: #{tpu_custom_call.1} parent=1 // pred_check
      _
    $region3: #{tpu_custom_call.1} parent=1 // pred_check_branch
      %10 = sbr.rel (0) target = $region5
    $region4: #{tpu_custom_call.1} parent=1 // pred_region
      _
    $region5: #{tpu_custom_call.1} parent=1 // pred_fallthru
      _
    // Predicated region
    $region6: #{tpu_custom_call.1} parent=1 // pred_check
      _
    $region7: #{tpu_custom_call.1} parent=1 // pred_check_branch
      %12 = sbr.rel (0) target = $region9
    $region8: #{tpu_custom_call.1} parent=1 // pred_region
      _
    $region9: #{tpu_custom_call.1} parent=1 // pred_fallthru
      _
    // Predicated region
    $region10: #{tpu_custom_call.1} parent=1 // pred_check
      _
    $region11: #{tpu_custom_call.1} parent=1 // pred_check_branch
      %14 = sbr.rel (0) target = $region13
    $region12: #{tpu_custom_call.1} parent=1 // pred_region
      _
    $region13: #{tpu_custom_call.1} parent=1 // pred_fallthru
      _
    %v15 = vld [vmem:[%s1] sm:$0xff]
    %v16 = vld [vmem:[%s0] sm:$0x1]
    %v17 = vld [vmem:[%s0 + $0x1] sm:$0x1]
    %v18 = vlaneseq
    %v19 = vshrl.u32 %v18, 7
    %v20 = vsub.s32 0, %v19
    %v21 = vrot.slane %v17, %v20
    %v22 = vmul.f32 %v15, %v21
    %v23 = vlaneseq
    %v24 = vshrl.u32 %v23, 7
    %v25 = vsub.s32 0, %v24
    %v26 = vrot.slane %v16, %v25
    %v27 = vadd.f32 %v22, %v26
    %v28 = vsub.f32 0.0, %v27
    %v29 = vmul.f32 %v28, 1.442695
    %v30 = vpow.pop %v29
    %v31 = vadd.f32 %v30, 1.0
    %v32 = vlog2.pop %v31
    %v33 = vmul.f32 %v32, 0.6931472
    %v34 = vmul.f32 -0.5, %v30
    %v35 = vadd.f32 %v34, 1.0
    %v36 = vmul.f32 %v35, %v30
    %v37 = vand.u32 2147483647, %v30
    %vm38 = vcmp.lt.f32.partialorder %v37, 0.0004427343
    %v39 = vsel %vm38, %v36, %v33
    %v40 = vsub.f32 0.6931472, %v39
    %v41 = vld [vmem:[%s2] sm:$0x1]
    %v42 = vld [vmem:[%s2 + $0x1] sm:$0x1]
    %v43 = vld [vmem:[%s2 + $0x2] sm:$0x1]
    %v44 = vld [vmem:[%s2 + $0x3] sm:$0x1]
    %46 = vset.pattern.permute.xlu0 2
    %47 = vperm.xlu0 %46, %v27
    %v48 = vpop.permute.xlu0 %47
    %v50 = vlaneseq
    %v51 = vshrl.u32 %v50, 7
    %v52 = vsub.s32 0, %v51
    %v53 = vrot.slane %v41, %v52
    %v54 = vmul.f32 %v48, %v53
    %55 = vset.pattern.permute.xlu0 1
    %56 = vperm.xlu0 %55, %v27
    %v57 = vpop.permute.xlu0 %56
    %v59 = vadd.f32 %v57, %v54
    %60 = vset.pattern.permute.xlu0 3
    %61 = vperm.xlu0 %60, %v27
    %v62 = vpop.permute.xlu0 %61
    %v64 = vlaneseq
    %v65 = vshrl.u32 %v64, 7
    %v66 = vsub.s32 0, %v65
    %v67 = vrot.slane %v42, %v66
    %v68 = vmul.f32 %v62, %v67
    %v69 = vadd.f32 %v59, %v68
    %v70 = vmul.f32 %v69, 1.442695
    %v71 = vpow.pop %v70
    %v72 = vadd.f32 %v71, 1.0
    %v73 = vrcp.pop %v72
    %v74 = vmul.f32 2.0, %v73
    %v75 = vadd.f32 %v71, 1.0
    %v76 = vlog2.pop %v75
    %v77 = vmul.f32 %v76, 0.6931472
    %v78 = vmul.f32 -0.5, %v71
    %v79 = vadd.f32 %v78, 1.0
    %v80 = vmul.f32 %v79, %v71
    %v81 = vand.u32 2147483647, %v71
    %vm82 = vcmp.lt.f32.partialorder %v81, 0.0004427343
    %v83 = vsel %vm82, %v80, %v77
    %v84 = vsub.f32 0.6931472, %v83
    %v85 = vlaneseq
    %v86 = vshrl.u32 %v85, 7
    %v87 = vsub.s32 0, %v86
    %v88 = vrot.slane %v43, %v87
    %90 = vset.pattern.permute.xlu0 0
    %91 = vperm.xlu0 %90, %v40
    %v92 = vpop.permute.xlu0 %91
    %v94 = vsub.f32 %v88, %v92
    %v95 = vmul.f32 %v74, %v94
    %v96 = vsub.f32 %v84, %v92
    %v97 = vadd.f32 %v96, %v95
    %v98 = vsub.f32 %v97, %v94
    %v99 = vmul.f32 %v95, 1.442695
    %v100 = vpow.pop %v99
    %v101 = vsub.f32 %v98, %v100
    %vm102 = vcmp.gt.f32.partialorder %v44, 0.0
    %v103 = vsel %vm102, 1, 0
    %v104 = vlaneseq
    %v105 = vshrl.u32 %v104, 7
    %v106 = vsub.s32 0, %v105
    %v107 = vrot.slane %v103, %v106
    %vm108 = vcmp.eq.s32.totalorder %v107, 1
    %v109 = vsel %vm108, %v101, 0.0
    %110 = vadd.xlane.f32.xlu0 %v109
    %v111 = vpop.xlane.xlu0 %110
    %v112 = vsub.f32 0.0, %v111
    %p113 = scmp.eq.s32.totalorder 0, 0
    // Predicated region
    $region14: #{tpu_custom_call.1} parent=1 // pred_check
      %p114 = pneg %p113
    $region15: #{tpu_custom_call.1} parent=1 // pred_check_branch
      %116 = sbr.rel (%p114) target = $region17
    $region16: #{tpu_custom_call.1} parent=1 // pred_region
      %v117 = vsub.f32 %v27, %v26
      %v118 = vmul.f32 %v117, %v117
      %v119 = vld [vmem:[%s0 + $0x2] sm:$0x1]
      %v120 = vlaneseq
      %v121 = vshrl.u32 %v120, 7
      %v122 = vsub.s32 0, %v121
      %v123 = vrot.slane %v119, %v122
      %v124 = vmul.f32 %v118, %v123
      %v125 = vld [vmem:[%s0 + $0x3] sm:$0x1]
      %v126 = vlaneseq
      %v127 = vshrl.u32 %v126, 7
      %v128 = vsub.s32 0, %v127
      %v129 = vrot.slane %v125, %v128
      %v130 = vadd.f32 %v124, %v129
      %vm131 = vcmask 31744
      %v132 = vsel %vm131, %v130, 0.0
      %133 = vadd.xlane.f32.xlu0 %v132
      %v134 = vpop.xlane.xlu0 %133
      %135 = vst [vmem:[#allocation2] sm:$0xff] %v134
    $region17: #{tpu_custom_call.1} parent=1 // pred_fallthru
      _
    %v136 = vld [vmem:[#allocation2] sm:$0xff]
    %v137 = vadd.f32 %v136, %v112
    %138 = vst [vmem:[#allocation2] sm:$0xff] %v137
    // Predicated region
    $region18: #{tpu_custom_call.1} parent=1 // pred_check
      _
    $region19: #{tpu_custom_call.1} parent=1 // pred_check_branch
      %140 = sbr.rel (0) target = $region21
    $region20: #{tpu_custom_call.1} parent=1 // pred_region
      %s142 = ssub.s32 128, 128
      %143 = vsyncadd [#allocation3], %s142
      %s145 = sshll.u32 [#allocation2], 4
      %s146 = int_to_ptr.vmem [resolvable:$true] %s145
      %148 = dma.vmem_to_hbm [thread:$0]  %s146, 128, %s3, [#allocation3]
    $region21: #{tpu_custom_call.1} parent=1 // pred_fallthru
      _
    // Predicated region
    $region22: #{tpu_custom_call.1} parent=1 // pred_check
      _
    $region23: #{tpu_custom_call.1} parent=1 // pred_check_branch
      %150 = sbr.rel (0) target = $region25
    $region24: #{tpu_custom_call.1} parent=1 // pred_region
      %151 = dma.done [#allocation3], 128
    $region25: #{tpu_custom_call.1} parent=1 // pred_fallthru
      _
    %152 = vsyncpa [#allocation3], 1

</llo_original>
